<compile_context>
chip_gen: v7x
topology: tpu7x:2x2x1
jax: 0.10.0
libtpu: 0.0.40
codegen_flags: <defaults>
</compile_context>

<pallas_src>
import functools

import jax
import jax.numpy as jnp
from jax.experimental import pallas as pl
from jax.experimental.pallas import tpu as pltpu


# ----------------------------------------------------------------------------
# small helpers (host-side tiling / padding decisions)
# ----------------------------------------------------------------------------
def _round_up(x, m):
    return ((x + m - 1) // m) * m


def _lane_tile(n):
    # n is already a multiple of 128; prefer >=512-lane tiles.
    for t in (512, 256, 128):
        if n % t == 0:
            return t
    return n


def _hw_tile(hw):
    for t in (512, 256, 128):
        if hw % t == 0:
            return t
    return hw  # small / irregular spatial sizes: one full-HW block (allowed)


def _pad_last(x, target):
    n = x.shape[-1]
    if n == target:
        return x
    pad = [(0, 0)] * (x.ndim - 1) + [(0, target - n)]
    return jnp.pad(x, pad)


# ----------------------------------------------------------------------------
# Projection kernels (orthogonal / perspective)
# ----------------------------------------------------------------------------
def _proj_rows(pts_ref, calib_ref):
    # pts_ref: (1, 3, tn), calib_ref: (1, 4, 4)
    # The rotation is only 3x3: do it as VPU broadcast-FMAs (MXU would be <3%
    # utilized and the kernel is memory-bound anyway).
    c = calib_ref[0]                       # (4, 4)
    x = pts_ref[0, 0:1, :]
    y = pts_ref[0, 1:2, :]
    z = pts_ref[0, 2:3, :]
    rows = []
    for i in range(3):
        rows.append(c[i:i + 1, 0:1] * x + c[i:i + 1, 1:2] * y
                    + c[i:i + 1, 2:3] * z + c[i:i + 1, 3:4])
    return rows


def _orthogonal_kernel(pts_ref, calib_ref, out_ref):
    rows = _proj_rows(pts_ref, calib_ref)
    out_ref[0] = jnp.concatenate(rows, axis=0).astype(out_ref.dtype)


def _perspective_kernel(pts_ref, calib_ref, out_ref):
    rx, ry, rz = _proj_rows(pts_ref, calib_ref)
    inv_z = pl.reciprocal(rz, approx=True)        # EUP slot, nearly free
    out = jnp.concatenate([rx * inv_z, ry * inv_z, rz], axis=0)
    out_ref[0] = out.astype(out_ref.dtype)


def _projection_call(kernel, points, calibs):
    B, three, N = points.shape
    assert three == 3
    Np = _round_up(N, 128)          # lane-dense (unmasked) stores
    tn = _lane_tile(Np)
    pts = _pad_last(points.astype(jnp.float32), Np)
    out = pl.pallas_call(
        kernel,
        out_shape=jax.ShapeDtypeStruct((B, 3, Np), jnp.float32),
        grid=(B, Np // tn),
        in_specs=[
            pl.BlockSpec((1, 3, tn), lambda b, n: (b, 0, n)),
            pl.BlockSpec((1, 4, 4), lambda b, n: (b, 0, 0)),
        ],
        out_specs=pl.BlockSpec((1, 3, tn), lambda b, n: (b, 0, n)),
        compiler_params=pltpu.CompilerParams(
            dimension_semantics=("parallel", "parallel")),
    )(pts, calibs.astype(jnp.float32))
    return out[:, :, :N]


def _apply_transforms(pts, transforms):
    # Matches PIFu geometry: transforms is a (2, 3) affine applied to xy.
    scale = transforms[:2, :2]
    shift = transforms[:2, 2:3]
    xy = jnp.einsum('ij,bjn->bin', scale, pts[:, :2, :]) + shift
    return jnp.concatenate([xy, pts[:, 2:3, :]], axis=1)


def orthogonal(points, calibs, transforms=None):
    pts = _projection_call(_orthogonal_kernel, points, calibs)
    if transforms is not None:
        pts = _apply_transforms(pts, transforms)
    return pts


def perspective(points, calibs, transforms=None):
    pts = _projection_call(_perspective_kernel, points, calibs)
    if transforms is not None:
        pts = _apply_transforms(pts, transforms)
    return pts


# ----------------------------------------------------------------------------
# index(): bilinear grid_sample of feat [B, C, H, W] at uv [B, 2, N] -> [B, C, N]
# Tiled one-hot bilinear-weight matrix (thw, tn) contracted on the MXU into an
# f32 accumulator over the HW tiles.  align_corners=True (original PIFu conv.).
# ----------------------------------------------------------------------------
def _index_kernel(feat_ref, uv_ref, out_ref, acc_ref, *, H, W, thw):
    # feat_ref: (1, C, thw)   slice of the flattened [C, H*W] feature map
    # uv_ref:   (1, 2, tn)    normalized sample locations in [-1, 1]
    # out_ref:  (1, C, tn)
    # acc_ref:  (C, tn) f32   accumulator across the HW grid axis
    hw = pl.program_id(2)

    @pl.when(hw == 0)
    def _():
        acc_ref[...] = jnp.zeros_like(acc_ref)

    feat = feat_ref[0]                       # (C, thw)
    u = uv_ref[0, 0:1, :]                    # (1, tn)
    v = uv_ref[0, 1:2, :]

    x = (u + 1.0) * (0.5 * (W - 1))          # align_corners=True
    y = (v + 1.0) * (0.5 * (H - 1))
    x0f = jnp.floor(x)
    y0f = jnp.floor(y)
    x0 = x0f.astype(jnp.int32)
    y0 = y0f.astype(jnp.int32)
    x1 = x0 + 1
    y1 = y0 + 1
    wx1 = x - x0f
    wx0 = 1.0 - wx1
    wy1 = y - y0f
    wy0 = 1.0 - wy1

    tn = u.shape[1]
    # flat H*W indices covered by the current HW tile
    local = jax.lax.broadcasted_iota(jnp.int32, (thw, tn), 0) + hw * thw

    def corner(xi, yi, w):
        # out-of-range corners contribute zero (grid_sample padding_mode='zeros');
        # indices outside this HW tile simply produce no one-hot match.
        valid = (xi >= 0) & (xi < W) & (yi >= 0) & (yi < H)
        wgt = jnp.where(valid, w, 0.0)                   # (1, tn)
        idx = yi * W + xi                                # (1, tn)
        return jnp.where(local == idx, wgt, 0.0)         # (thw, tn)

    wmat = (corner(x0, y0, wx0 * wy0) + corner(x1, y0, wx1 * wy0)
            + corner(x0, y1, wx0 * wy1) + corner(x1, y1, wx1 * wy1))

    # Contraction runs in the feature dtype (pass bf16 feat for the bf16 MXU
    # path); accumulation is always f32.
    acc_ref[...] += jnp.dot(feat, wmat.astype(feat.dtype),
                            preferred_element_type=jnp.float32)

    @pl.when(hw == pl.num_programs(2) - 1)
    def _():
        out_ref[0] = acc_ref[...].astype(out_ref.dtype)


def index(feat, uv):
    B, C, H, W = feat.shape
    N = uv.shape[2]
    HW = H * W
    Np = _round_up(N, 128)
    tn = _lane_tile(Np)
    thw = _hw_tile(HW)

    feat_flat = feat.reshape(B, C, HW)             # plain-JAX glue reshape
    uv_p = _pad_last(uv.astype(jnp.float32), Np)

    kernel = functools.partial(_index_kernel, H=H, W=W, thw=thw)
    out = pl.pallas_call(
        kernel,
        out_shape=jax.ShapeDtypeStruct((B, C, Np), jnp.float32),
        grid=(B, Np // tn, HW // thw),
        in_specs=[
            pl.BlockSpec((1, C, thw), lambda b, n, h: (b, 0, h)),
            pl.BlockSpec((1, 2, tn), lambda b, n, h: (b, 0, n)),
        ],
        out_specs=pl.BlockSpec((1, C, tn), lambda b, n, h: (b, 0, n)),
        scratch_shapes=[pltpu.VMEM((C, tn), jnp.float32)],
        compiler_params=pltpu.CompilerParams(
            dimension_semantics=("parallel", "parallel", "arbitrary")),
    )(feat_flat, uv_p)
    return out[:, :, :N]


# ----------------------------------------------------------------------------
# MSELoss between preds [B, Res, N] and labels [B, Res, N]  (scalar mean)
# Tiled over row blocks with a (1,1) accumulator scratch; lane-dense columns.
# ----------------------------------------------------------------------------
def _mse_kernel(p_ref, l_ref, o_ref, acc_ref, *, inv_denom):
    i = pl.program_id(0)

    @pl.when(i == 0)
    def _():
        acc_ref[...] = jnp.zeros_like(acc_ref)

    d = p_ref[...].astype(jnp.float32) - l_ref[...].astype(jnp.float32)
    acc_ref[...] += jnp.sum(d * d, keepdims=True)

    @pl.when(i == pl.num_programs(0) - 1)
    def _():
        o_ref[...] = acc_ref[...] * inv_denom


def mse_loss(preds, labels):
    B, R, N = preds.shape
    rows = B * R
    Np = _round_up(N, 128)                          # lane-dense loads
    p2 = _pad_last(preds.reshape(rows, N).astype(jnp.float32), Np)
    l2 = _pad_last(labels.reshape(rows, N).astype(jnp.float32), Np)

    rows_p = _round_up(rows, 8)
    if rows_p != rows:                              # zero rows contribute nothing
        p2 = jnp.pad(p2, ((0, rows_p - rows), (0, 0)))
        l2 = jnp.pad(l2, ((0, rows_p - rows), (0, 0)))

    # Row tile: largest candidate that divides rows_p and keeps each input
    # block around <=2 MiB so the (double-buffered) pipeline stays in VMEM.
    cap = max(8, (2 * 1024 * 1024) // (4 * Np) // 8 * 8)
    tr = 8
    for t in (512, 256, 128, 64, 32, 16, 8):
        if t <= cap and rows_p % t == 0:
            tr = t
            break

    kernel = functools.partial(_mse_kernel, inv_denom=1.0 / float(rows * N))
    out = pl.pallas_call(
        kernel,
        out_shape=jax.ShapeDtypeStruct((1, 1), jnp.float32),
        grid=(rows_p // tr,),
        in_specs=[
            pl.BlockSpec((tr, Np), lambda i: (i, 0)),
            pl.BlockSpec((tr, Np), lambda i: (i, 0)),
        ],
        out_specs=pl.BlockSpec((1, 1), lambda i: (0, 0)),
        scratch_shapes=[pltpu.VMEM((1, 1), jnp.float32)],
        compiler_params=pltpu.CompilerParams(dimension_semantics=("arbitrary",)),
    )(p2, l2)
    return out[0, 0]


# ----------------------------------------------------------------------------
# BasePIFuNet (JAX / Pallas version)
# ----------------------------------------------------------------------------
class BasePIFuNet:
    def __init__(self, projection_mode='orthogonal', error_term=None):
        self.name = 'base'
        self.error_term = error_term if error_term is not None else mse_loss
        self.index = index
        self.projection = orthogonal if projection_mode == 'orthogonal' else perspective
        self.preds = None
        self.labels = None
        self.preds_normal = None
        self.labels_normal = None

    def forward(self, in_tensor_dict):
        return None

    def filter(self, images):
        return None

    def query(self, xyz, points):
        return None

    def get_preds(self):
        return self.preds[-1]

    def get_error(self, in_tensor_dict):
        return None


# ----------------------------------------------------------------------------
# Plain-JAX references for correctness checks
# ----------------------------------------------------------------------------
def _orthogonal_ref(points, calibs):
    rot = calibs[:, :3, :3]
    trans = calibs[:, :3, 3:4]
    return jnp.einsum('bij,bjn->bin', rot, points) + trans


def _perspective_ref(points, calibs):
    rot = calibs[:, :3, :3]
    trans = calibs[:, :3, 3:4]
    homo = jnp.einsum('bij,bjn->bin', rot, points) + trans
    xy = homo[:, :2, :] / homo[:, 2:3, :]
    return jnp.concatenate([xy, homo[:, 2:3, :]], axis=1)


def _index_ref(feat, uv):
    B, C, H, W = feat.shape
    x = (uv[:, 0] + 1.0) * 0.5 * (W - 1)
    y = (uv[:, 1] + 1.0) * 0.5 * (H - 1)
    x0 = jnp.floor(x).astype(jnp.int32)
    y0 = jnp.floor(y).astype(jnp.int32)
    x1 = x0 + 1
    y1 = y0 + 1
    wx1 = x - x0
    wx0 = 1.0 - wx1
    wy1 = y - y0
    wy0 = 1.0 - wy1
    feat_flat = feat.reshape(B, C, H * W)

    def gather(xi, yi, w):
        valid = ((xi >= 0) & (xi < W) & (yi >= 0) & (yi < H)).astype(jnp.float32)
        xi_c = jnp.clip(xi, 0, W - 1)
        yi_c = jnp.clip(yi, 0, H - 1)
        idx = (yi_c * W + xi_c)[:, None, :]                       # (B, 1, N)
        vals = jnp.take_along_axis(
            feat_flat, jnp.broadcast_to(idx, (B, C, idx.shape[2])), axis=2)
        return vals * (w * valid)[:, None, :]

    return (gather(x0, y0, wx0 * wy0) + gather(x1, y0, wx1 * wy0)
            + gather(x0, y1, wx0 * wy1) + gather(x1, y1, wx1 * wy1))


# ----------------------------------------------------------------------------
if __name__ == "__main__":
    key = jax.random.PRNGKey(0)
    # N chosen as a lane-dense multiple of 128 (>=512).
    B, C, H, W, N, RES = 2, 4, 16, 16, 512, 1
    k1, k2, k3, k4 = jax.random.split(key, 4)

    images = jax.random.normal(k1, (B, C, H, W), jnp.float32)
    points = jax.random.normal(k2, (B, 3, N), jnp.float32)

    # Deterministic calibration: scaled identity rotation + small perturbation,
    # translation pushing z away from 0 so the perspective divide is safe.
    rot = (0.5 * jnp.eye(3, dtype=jnp.float32)[None]
           + 0.05 * jax.random.normal(k3, (B, 3, 3), jnp.float32))
    trans = jnp.tile(jnp.array([[0.1], [-0.1], [2.5]], jnp.float32)[None], (B, 1, 1))
    calibs = jnp.concatenate(
        [jnp.concatenate([rot, trans], axis=2),
         jnp.tile(jnp.array([[[0.0, 0.0, 0.0, 1.0]]], jnp.float32), (B, 1, 1))],
        axis=1)                                                   # (B, 4, 4)

    net = BasePIFuNet(projection_mode='orthogonal')

    # forward() of the base class returns None (as in PyTorch).
    assert net.forward({'img': images}) is None
    assert net.filter(images) is None
    assert net.query(points, points) is None

    # Orthogonal projection (Pallas, VPU FMAs) vs reference.
    xyz = net.projection(points, calibs)                          # [B, 3, N]
    xyz_ref = _orthogonal_ref(points, calibs)
    assert bool(jnp.allclose(xyz, xyz_ref, atol=1e-4, rtol=1e-4))

    # Perspective projection (EUP approx reciprocal) vs reference (loose tol
    # because of the approximate reciprocal).
    xyz_persp = perspective(points, calibs)
    persp_ref = _perspective_ref(points, calibs)
    assert xyz_persp.shape == (B, 3, N)
    assert bool(jnp.allclose(xyz_persp, persp_ref, atol=1e-2, rtol=1e-2))

    # Optional 2D transforms path also runs (matches PIFu geometry helpers).
    tfm = jnp.array([[1.0, 0.0, 0.1],
                     [0.0, 1.0, -0.1]], jnp.float32)
    _ = orthogonal(points, calibs, tfm)

    # Bilinear feature indexing (tiled Pallas kernel) vs reference.
    uv = jnp.clip(xyz[:, :2, :], -1.0, 1.0)                       # [B, 2, N]
    feats = net.index(images, uv)                                 # [B, C, N]
    feats_ref = _index_ref(images, uv)
    assert bool(jnp.allclose(feats, feats_ref, atol=1e-4, rtol=1e-4))

    # bf16 feature maps run the bf16 MXU path with f32 accumulation.
    feats_bf16 = net.index(images.astype(jnp.bfloat16), uv)
    assert bool(jnp.allclose(feats_bf16, feats_ref, atol=5e-2, rtol=5e-2))

    # Predictions / labels [B, Res, N] and tiled MSE error term vs reference.
    preds = feats[:, :RES, :]
    labels = jax.random.uniform(k4, (B, RES, N), jnp.float32)
    net.preds = [preds]
    net.labels = labels
    assert net.get_preds().shape == (B, RES, N)
    err = net.error_term(preds, labels)
    err_ref = jnp.mean((preds - labels) ** 2)
    assert bool(jnp.allclose(err, err_ref, atol=1e-5, rtol=1e-5))

    jax.block_until_ready((xyz, xyz_persp, feats, feats_bf16, err))
    print("KERNEL_OK")
</pallas_src>

<mosaic_0001>
module attributes {stable_mosaic.version = 11 : i64} {
  func.func @_orthogonal_kernel(%arg0: i32, %arg1: i32, %arg2: memref<1x3x512xf32, #tpu.memory_space<vmem>>, %arg3: memref<1x4x4xf32, #tpu.memory_space<vmem>>, %arg4: memref<1x3x512xf32, #tpu.memory_space<vmem>>) attributes {dimension_semantics = [#tpu.dimension_semantics<parallel>, #tpu.dimension_semantics<parallel>], iteration_bounds = array<i64: 2, 1>, scalar_prefetch = 0 : i64, scratch_operands = 0 : i64, tpu.core_type = #tpu.core_type<tc>, window_params = [{transform_indices = @transform_0, window_bounds = array<i64: 1, 3, 512>}, {transform_indices = @transform_1, window_bounds = array<i64: 1, 4, 4>}, {transform_indices = @transform_2, window_bounds = array<i64: 1, 3, 512>}]} {
    %c0 = arith.constant 0 : index
    %c0_0 = arith.constant 0 : index
    %c0_1 = arith.constant 0 : index
    %0 = vector.load %arg3[%c0, %c0_0, %c0_1] : memref<1x4x4xf32, #tpu.memory_space<vmem>>, vector<1x4x4xf32>
    %1 = vector.shape_cast %0 : vector<1x4x4xf32> to vector<4x4xf32>
    %c0_2 = arith.constant 0 : index
    %c0_3 = arith.constant 0 : index
    %c0_4 = arith.constant 0 : index
    %2 = vector.load %arg2[%c0_2, %c0_3, %c0_4] : memref<1x3x512xf32, #tpu.memory_space<vmem>>, vector<1x1x512xf32>
    %3 = vector.shape_cast %2 : vector<1x1x512xf32> to vector<1x512xf32>
    %c0_5 = arith.constant 0 : index
    %c1 = arith.constant 1 : index
    %c0_6 = arith.constant 0 : index
    %4 = vector.load %arg2[%c0_5, %c1, %c0_6] : memref<1x3x512xf32, #tpu.memory_space<vmem>>, vector<1x1x512xf32>
    %5 = vector.shape_cast %4 : vector<1x1x512xf32> to vector<1x512xf32>
    %c0_7 = arith.constant 0 : index
    %c2 = arith.constant 2 : index
    %c0_8 = arith.constant 0 : index
    %6 = vector.load %arg2[%c0_7, %c2, %c0_8] : memref<1x3x512xf32, #tpu.memory_space<vmem>>, vector<1x1x512xf32>
    %7 = vector.shape_cast %6 : vector<1x1x512xf32> to vector<1x512xf32>
    %8 = vector.extract_strided_slice %1 {offsets = [0, 0], sizes = [1, 1], strides = [1, 1]} : vector<4x4xf32> to vector<1x1xf32>
    %9 = vector.broadcast %8 : vector<1x1xf32> to vector<1x512xf32>
    %10 = arith.mulf %9, %3 : vector<1x512xf32>
    %11 = vector.extract_strided_slice %1 {offsets = [0, 1], sizes = [1, 1], strides = [1, 1]} : vector<4x4xf32> to vector<1x1xf32>
    %12 = vector.broadcast %11 : vector<1x1xf32> to vector<1x512xf32>
    %13 = arith.mulf %12, %5 : vector<1x512xf32>
    %14 = arith.addf %10, %13 : vector<1x512xf32>
    %15 = vector.extract_strided_slice %1 {offsets = [0, 2], sizes = [1, 1], strides = [1, 1]} : vector<4x4xf32> to vector<1x1xf32>
    %16 = vector.broadcast %15 : vector<1x1xf32> to vector<1x512xf32>
    %17 = arith.mulf %16, %7 : vector<1x512xf32>
    %18 = arith.addf %14, %17 : vector<1x512xf32>
    %19 = vector.extract_strided_slice %1 {offsets = [0, 3], sizes = [1, 1], strides = [1, 1]} : vector<4x4xf32> to vector<1x1xf32>
    %20 = vector.broadcast %19 : vector<1x1xf32> to vector<1x512xf32>
    %21 = arith.addf %18, %20 : vector<1x512xf32>
    %22 = vector.extract_strided_slice %1 {offsets = [1, 0], sizes = [1, 1], strides = [1, 1]} : vector<4x4xf32> to vector<1x1xf32>
    %23 = vector.broadcast %22 : vector<1x1xf32> to vector<1x512xf32>
    %24 = arith.mulf %23, %3 : vector<1x512xf32>
    %25 = vector.extract_strided_slice %1 {offsets = [1, 1], sizes = [1, 1], strides = [1, 1]} : vector<4x4xf32> to vector<1x1xf32>
    %26 = vector.broadcast %25 : vector<1x1xf32> to vector<1x512xf32>
    %27 = arith.mulf %26, %5 : vector<1x512xf32>
    %28 = arith.addf %24, %27 : vector<1x512xf32>
    %29 = vector.extract_strided_slice %1 {offsets = [1, 2], sizes = [1, 1], strides = [1, 1]} : vector<4x4xf32> to vector<1x1xf32>
    %30 = vector.broadcast %29 : vector<1x1xf32> to vector<1x512xf32>
    %31 = arith.mulf %30, %7 : vector<1x512xf32>
    %32 = arith.addf %28, %31 : vector<1x512xf32>
    %33 = vector.extract_strided_slice %1 {offsets = [1, 3], sizes = [1, 1], strides = [1, 1]} : vector<4x4xf32> to vector<1x1xf32>
    %34 = vector.broadcast %33 : vector<1x1xf32> to vector<1x512xf32>
    %35 = arith.addf %32, %34 : vector<1x512xf32>
    %36 = vector.extract_strided_slice %1 {offsets = [2, 0], sizes = [1, 1], strides = [1, 1]} : vector<4x4xf32> to vector<1x1xf32>
    %37 = vector.broadcast %36 : vector<1x1xf32> to vector<1x512xf32>
    %38 = arith.mulf %37, %3 : vector<1x512xf32>
    %39 = vector.extract_strided_slice %1 {offsets = [2, 1], sizes = [1, 1], strides = [1, 1]} : vector<4x4xf32> to vector<1x1xf32>
    %40 = vector.broadcast %39 : vector<1x1xf32> to vector<1x512xf32>
    %41 = arith.mulf %40, %5 : vector<1x512xf32>
    %42 = arith.addf %38, %41 : vector<1x512xf32>
    %43 = vector.extract_strided_slice %1 {offsets = [2, 2], sizes = [1, 1], strides = [1, 1]} : vector<4x4xf32> to vector<1x1xf32>
    %44 = vector.broadcast %43 : vector<1x1xf32> to vector<1x512xf32>
    %45 = arith.mulf %44, %7 : vector<1x512xf32>
    %46 = arith.addf %42, %45 : vector<1x512xf32>
    %47 = vector.extract_strided_slice %1 {offsets = [2, 3], sizes = [1, 1], strides = [1, 1]} : vector<4x4xf32> to vector<1x1xf32>
    %48 = vector.broadcast %47 : vector<1x1xf32> to vector<1x512xf32>
    %49 = arith.addf %46, %48 : vector<1x512xf32>
    %50 = tpu.concatenate %21, %35, %49 in 0 : vector<1x512xf32>, vector<1x512xf32>, vector<1x512xf32> -> vector<3x512xf32>
    %c0_9 = arith.constant 0 : index
    %c0_10 = arith.constant 0 : index
    %c0_11 = arith.constant 0 : index
    %51 = vector.load %arg4[%c0_9, %c0_10, %c0_11] : memref<1x3x512xf32, #tpu.memory_space<vmem>>, vector<1x3x512xf32>
    %52 = vector.shape_cast %51 : vector<1x3x512xf32> to vector<3x512xf32>
    %53 = vector.shape_cast %50 : vector<3x512xf32> to vector<1x3x512xf32>
    tpu.vector_store %arg4[%c0_9, %c0_10, %c0_11], %53 {strides = array<i32>} : memref<1x3x512xf32, #tpu.memory_space<vmem>>, vector<1x3x512xf32>,
    return
  }
  func.func @transform_0(%arg0: i32, %arg1: i32) -> (i32, i32, i32) {
    %c0_i32 = arith.constant 0 : i32
    %c0_i32_0 = arith.constant 0 : i32
    return %arg0, %c0_i32, %arg1 : i32, i32, i32
  }
  func.func @transform_1(%arg0: i32, %arg1: i32) -> (i32, i32, i32) {
    %c0_i32 = arith.constant 0 : i32
    %c0_i32_0 = arith.constant 0 : i32
    %c0_i32_1 = arith.constant 0 : i32
    return %arg0, %c0_i32, %c0_i32_0 : i32, i32, i32
  }
  func.func @transform_2(%arg0: i32, %arg1: i32) -> (i32, i32, i32) {
    %c0_i32 = arith.constant 0 : i32
    %c0_i32_0 = arith.constant 0 : i32
    return %arg0, %c0_i32, %arg1 : i32, i32, i32
  }
}

</mosaic_0001>

<llo_original>
// kernel: tpu_custom_call.1
$region0: #{tpu_custom_call.1}
  #allocation0 [shape = 'u32[]', space=smem, size = 0x4, offset = 0x4, fixed_abs, tag = 'smem constant byte address 0x4 - core index']
  #allocation1 [shape = 'u32[144,128]{1,0:T(1,128)}', space=vmem, size = 0x12000, scoped, tag = 'internal scratch']
  %s0 = inlined_call_operand.vmem [shape: f32[2,3,512], index: 0, kind: input, shape index: {}]
  %s1 = inlined_call_operand.vmem [shape: f32[2,4,4], index: 1, kind: input, shape index: {}]
  %s2 = inlined_call_operand.vmem [shape: f32[2,3,512], index: 2, kind: output, shape index: {}]
  %s3 = sld [smem:[#allocation0]]
  $region41: #{tpu_custom_call.1} parent=0
    _
  %s5 = ssub.s32 1, %s3
  %s6 = scalar_select 0, %s5, %s3
  loop: start=0, step=1, limit=4
  $region2: #{tpu_custom_call.1} parent=0 // loop_pre_header
    _
  $region3: #{tpu_custom_call.1} parent=0 // loop_header
    %s8 = sphi 0, %s12
    %p9 = scmp.ge.s32.totalorder %s8, 4
    %s15 = sphi 0, %s27
    %s16 = sphi 0, %s23
    %s17 = sphi 0, %s15
    %s18 = sphi 0, %s16
    %s19 = sphi 0, %s17
    %s20 = sphi 0, %s18
    %s32 = sphi 0, %s34
    %s35 = sphi 0, %s32
    %s36 = sphi 0, %s35
    %s52 = sphi 0, %s36
    %s58 = sphi 0, %s60
    %s61 = sphi 0, %s58
    %s62 = sphi 0, %s61
    %s78 = sphi 0, %s62
    %s86 = sphi 0, %s88
    %s89 = sphi 0, %s86
    %s90 = sphi 0, %s89
    %s106 = sphi 0, %s90
  $region4: #{tpu_custom_call.1} parent=0 // loop_header_branch
    %11 = sbr.rel (%p9) target = $region8
  $region5: #{tpu_custom_call.1} parent=0 // loop_body
    %s13 = ssub.s32 %s8, 1
    %s14 = ssub.s32 %s8, 2
    %s21 = sadd.s32 1, %s16
    %p22 = scmp.ge.s32.totalorder %s21, 1
    %s23 = scalar_select %p22, 0, %s21
    %s24 = sadd.s32 1, %s15
    %s25 = scalar_select %p22, %s24, %s15
    %p26 = scmp.ge.s32.totalorder %s25, 2
    %s27 = scalar_select %p26, 0, %s25
    %s28 = ssub.s32 %s15, %s27
    %s29 = ssub.s32 %s16, %s23
    %s30 = sor.u32 %s28, %s29
    %p31 = scmp.eq.s32.totalorder %s30, 0
    %s33 = sadd.s32 %s32, 1
    %s34 = scalar_select %p31, %s32, %s33
    %p37 = pneg %p31
    %p38 = scmp.eq.s32.totalorder %s8, 1
    %p39 = por %p37, %p38
    %p40 = scmp.ne.s32.totalorder %s32, %s35
    %p41 = scmp.eq.s32.totalorder %s8, 0
    %p42 = por %p40, %p41
    %p43 = scmp.ne.s32.totalorder %s32, %s35
    %p44 = scmp.eq.s32.totalorder %s13, 1
    %p45 = por %p43, %p44
    %p46 = scmp.ne.s32.totalorder %s35, %s36
    %p47 = scmp.eq.s32.totalorder %s13, 0
    %p48 = por %p46, %p47
    %p49 = scmp.ne.s32.totalorder %s35, %s36
    %p50 = scmp.eq.s32.totalorder %s14, 1
    %p51 = por %p49, %p50
    %p53 = scmp.ne.s32.totalorder %s36, %s52
    %p54 = scmp.eq.s32.totalorder %s14, 0
    %p55 = por %p53, %p54
    %s56 = ssub.s32 %s15, %s27
    %p57 = scmp.eq.s32.totalorder %s56, 0
    %s59 = sadd.s32 %s58, 1
    %s60 = scalar_select %p57, %s58, %s59
    %p63 = pneg %p57
    %p64 = scmp.eq.s32.totalorder %s8, 1
    %p65 = por %p63, %p64
    %p66 = scmp.ne.s32.totalorder %s58, %s61
    %p67 = scmp.eq.s32.totalorder %s8, 0
    %p68 = por %p66, %p67
    %p69 = scmp.ne.s32.totalorder %s58, %s61
    %p70 = scmp.eq.s32.totalorder %s13, 1
    %p71 = por %p69, %p70
    %p72 = scmp.ne.s32.totalorder %s61, %s62
    %p73 = scmp.eq.s32.totalorder %s13, 0
    %p74 = por %p72, %p73
    %p75 = scmp.ne.s32.totalorder %s61, %s62
    %p76 = scmp.eq.s32.totalorder %s14, 1
    %p77 = por %p75, %p76
    %p79 = scmp.ne.s32.totalorder %s62, %s78
    %p80 = scmp.eq.s32.totalorder %s14, 0
    %p81 = por %p79, %p80
    %s82 = ssub.s32 %s15, %s27
    %s83 = ssub.s32 %s16, %s23
    %s84 = sor.u32 %s82, %s83
    %p85 = scmp.eq.s32.totalorder %s84, 0
    %s87 = sadd.s32 %s86, 1
    %s88 = scalar_select %p85, %s86, %s87
    %p91 = pneg %p85
    %p92 = scmp.eq.s32.totalorder %s8, 1
    %p93 = por %p91, %p92
    %p94 = scmp.ne.s32.totalorder %s86, %s89
    %p95 = scmp.eq.s32.totalorder %s8, 0
    %p96 = por %p94, %p95
    %p97 = scmp.ne.s32.totalorder %s86, %s89
    %p98 = scmp.eq.s32.totalorder %s13, 1
    %p99 = por %p97, %p98
    %p100 = scmp.ne.s32.totalorder %s89, %s90
    %p101 = scmp.eq.s32.totalorder %s13, 0
    %p102 = por %p100, %p101
    %p103 = scmp.ne.s32.totalorder %s89, %s90
    %p104 = scmp.eq.s32.totalorder %s14, 1
    %p105 = por %p103, %p104
    %p107 = scmp.ne.s32.totalorder %s90, %s106
    %p108 = scmp.eq.s32.totalorder %s14, 0
    %p109 = por %p107, %p108
    %p110 = scmp.le.s32.totalorder 1, %s8
    %p111 = scmp.lt.s32.totalorder %s8, 3
    %p112 = pnand %p110, %p111
    %p113 = pneg %p112
    // Predicated region
    $region9: #{tpu_custom_call.1} parent=5 // pred_check
      _
    $region10: #{tpu_custom_call.1} parent=5 // pred_check_branch
      %115 = sbr.rel (%p112) target = $region12
    $region11: #{tpu_custom_call.1} parent=5 // pred_region
      %s116 = ssub.s32 %s8, 1
    $region12: #{tpu_custom_call.1} parent=5 // pred_fallthru
      _
    %p117 = scmp.lt.s32.totalorder %s8, 2
    // Predicated region
    $region13: #{tpu_custom_call.1} parent=5 // pred_check
      %p118 = pneg %p117
    $region14: #{tpu_custom_call.1} parent=5 // pred_check_branch
      %120 = sbr.rel (%p118) target = $region16
    $region15: #{tpu_custom_call.1} parent=5 // pred_region
      // Predicated region
      $region17: #{tpu_custom_call.1} parent=15 // pred_check
        %p121 = pneg %p42
      $region18: #{tpu_custom_call.1} parent=15 // pred_check_branch
        %123 = sbr.rel (%p121) target = $region20
      $region19: #{tpu_custom_call.1} parent=15 // pred_region
        %s124 = smul.u32 4, %s16
        %p125 = scmp.lt.s32.totalorder %s15, 1
        %s126 = scalar_select %p125, %s15, 1
        %p127 = scmp.lt.s32.totalorder %s124, 3
        %s128 = scalar_select %p127, %s124, 3
        %s129 = smul.addr %s126, 4
        %s130 = sadd.s32 %s128, %s129
        %s131 = smul.addr %s130, 4
        %s132 = scalar_lea.vmem %s0, %s131
        %s133 = smul.u32 4, %s16
      $region20: #{tpu_custom_call.1} parent=15 // pred_fallthru
        _
      // Predicated region
      $region21: #{tpu_custom_call.1} parent=15 // pred_check
        %p134 = pneg %p68
      $region22: #{tpu_custom_call.1} parent=15 // pred_check_branch
        %136 = sbr.rel (%p134) target = $region24
      $region23: #{tpu_custom_call.1} parent=15 // pred_region
        %p137 = scmp.lt.s32.totalorder %s15, 1
        %s138 = scalar_select %p137, %s15, 1
        %s139 = smul.addr %s138, 4
        %s140 = scalar_lea.vmem %s1, %s139
      $region24: #{tpu_custom_call.1} parent=15 // pred_fallthru
        _
    $region16: #{tpu_custom_call.1} parent=5 // pred_fallthru
      _
    %p141 = scmp.le.s32.totalorder 1, %s8
    %p142 = scmp.lt.s32.totalorder %s8, 3
    %p143 = pnand %p141, %p142
    %p144 = pneg %p143
    // Predicated region
    $region25: #{tpu_custom_call.1} parent=5 // pred_check
      _
    $region26: #{tpu_custom_call.1} parent=5 // pred_check_branch
      %146 = sbr.rel (%p143) target = $region28
    $region27: #{tpu_custom_call.1} parent=5 // pred_region
      %s147 = ssub.s32 %s8, 1
      %s148 = smul.u32 4, %s18
      %p149 = scmp.lt.s32.totalorder %s17, 1
      %s150 = scalar_select %p149, %s17, 1
      %p151 = scmp.lt.s32.totalorder %s148, 3
      %s152 = scalar_select %p151, %s148, 3
      %s153 = smul.addr %s150, 4
      %s154 = sadd.s32 %s152, %s153
      %s155 = smul.addr %s154, 4
      %s156 = scalar_lea.vmem %s0, %s155
      %p157 = pneg %p48
      %p158 = pneg %p45
      %p159 = scmp.lt.s32.totalorder %s17, 1
      %s160 = scalar_select %p159, %s17, 1
      %s161 = smul.addr %s160, 4
      %s162 = scalar_lea.vmem %s1, %s161
      %p163 = pneg %p74
      %p164 = pneg %p71
      %p165 = pneg %p102
      %p166 = pneg %p99
      %s167 = smul.u32 4, %s18
      %p168 = scmp.lt.s32.totalorder %s17, 1
      %s169 = scalar_select %p168, %s17, 1
      %p170 = scmp.lt.s32.totalorder %s167, 3
      %s171 = scalar_select %p170, %s167, 3
      %s172 = smul.addr %s169, 4
      %s173 = sadd.s32 %s171, %s172
      %s174 = smul.addr %s173, 4
      %s175 = scalar_lea.vmem %s2, %s174
      %s176 = smul.u32 4, %s18
      %p177 = scmp.lt.s32.totalorder %s17, 1
      %s178 = scalar_select %p177, %s17, 1
      %p179 = scmp.lt.s32.totalorder %s176, 3
      %s180 = scalar_select %p179, %s176, 3
      %s181 = smul.addr %s178, 4
      %s182 = sadd.s32 %s180, %s181
      %s183 = smul.addr %s182, 4
      %s184 = scalar_lea.vmem %s0, %s183
      %s185 = smul.u32 4, %s18
      %p186 = scmp.lt.s32.totalorder %s17, 1
      %s187 = scalar_select %p186, %s17, 1
      %s188 = smul.addr %s187, 4
      %s189 = scalar_lea.vmem %s1, %s188
      %s190 = smul.u32 4, %s18
      %p191 = scmp.lt.s32.totalorder %s17, 1
      %s192 = scalar_select %p191, %s17, 1
      %p193 = scmp.lt.s32.totalorder %s190, 3
      %s194 = scalar_select %p193, %s190, 3
      %s195 = smul.addr %s192, 4
      %s196 = sadd.s32 %s194, %s195
      %s197 = smul.addr %s196, 4
      %s198 = scalar_lea.vmem %s2, %s197
      %s199 = smul.u32 4, %s18
      %v200 = vld [vmem:[%s189] sm:$0xf]
      %v201 = vld [vmem:[%s184] ss:$4 sm:$0xf]
      %s202 = scalar_lea.vmem %s184, 1
      %v203 = vld [vmem:[%s202] ss:$4 sm:$0xf]
      %s204 = scalar_lea.vmem %s184, 2
      %v205 = vld [vmem:[%s204] ss:$4 sm:$0xf]
      %207 = vset.pattern.permute.xlu0 0
      %208 = vperm.xlu0 %207, %v200
      %v209 = vpop.permute.xlu0 %208
      %v212 = vlaneseq
      %v213 = vshrl.u32 %v212, 7
      %v214 = vsub.s32 0, %v213
      %v215 = vrot.slane %v201, %v214
      %v216 = vlaneseq
      %v217 = vshrl.u32 %v216, 7
      %v218 = vsub.s32 1, %v217
      %v219 = vrot.slane %v201, %v218
      %v220 = vlaneseq
      %v221 = vshrl.u32 %v220, 7
      %v222 = vsub.s32 2, %v221
      %v223 = vrot.slane %v201, %v222
      %v224 = vlaneseq
      %v225 = vshrl.u32 %v224, 7
      %v226 = vsub.s32 3, %v225
      %v227 = vrot.slane %v201, %v226
      %v232 = vmul.f32 %v209, %v215
      %v233 = vmul.f32 %v209, %v219
      %v234 = vmul.f32 %v209, %v223
      %v235 = vmul.f32 %v209, %v227
      %236 = vset.pattern.permute.xlu0 1
      %237 = vperm.xlu0 %236, %v200
      %v238 = vpop.permute.xlu0 %237
      %v241 = vlaneseq
      %v242 = vshrl.u32 %v241, 7
      %v243 = vsub.s32 0, %v242
      %v244 = vrot.slane %v203, %v243
      %v245 = vlaneseq
      %v246 = vshrl.u32 %v245, 7
      %v247 = vsub.s32 1, %v246
      %v248 = vrot.slane %v203, %v247
      %v249 = vlaneseq
      %v250 = vshrl.u32 %v249, 7
      %v251 = vsub.s32 2, %v250
      %v252 = vrot.slane %v203, %v251
      %v253 = vlaneseq
      %v254 = vshrl.u32 %v253, 7
      %v255 = vsub.s32 3, %v254
      %v256 = vrot.slane %v203, %v255
      %v261 = vmul.f32 %v238, %v244
      %v262 = vmul.f32 %v238, %v248
      %v263 = vmul.f32 %v238, %v252
      %v264 = vmul.f32 %v238, %v256
      %v265 = vadd.f32 %v232, %v261
      %v266 = vadd.f32 %v233, %v262
      %v267 = vadd.f32 %v234, %v263
      %v268 = vadd.f32 %v235, %v264
      %269 = vset.pattern.permute.xlu0 2
      %270 = vperm.xlu0 %269, %v200
      %v271 = vpop.permute.xlu0 %270
      %v274 = vlaneseq
      %v275 = vshrl.u32 %v274, 7
      %v276 = vsub.s32 0, %v275
      %v277 = vrot.slane %v205, %v276
      %v278 = vlaneseq
      %v279 = vshrl.u32 %v278, 7
      %v280 = vsub.s32 1, %v279
      %v281 = vrot.slane %v205, %v280
      %v282 = vlaneseq
      %v283 = vshrl.u32 %v282, 7
      %v284 = vsub.s32 2, %v283
      %v285 = vrot.slane %v205, %v284
      %v286 = vlaneseq
      %v287 = vshrl.u32 %v286, 7
      %v288 = vsub.s32 3, %v287
      %v289 = vrot.slane %v205, %v288
      %v294 = vmul.f32 %v271, %v277
      %v295 = vmul.f32 %v271, %v281
      %v296 = vmul.f32 %v271, %v285
      %v297 = vmul.f32 %v271, %v289
      %v298 = vadd.f32 %v265, %v294
      %v299 = vadd.f32 %v266, %v295
      %v300 = vadd.f32 %v267, %v296
      %v301 = vadd.f32 %v268, %v297
      %302 = vset.pattern.permute.xlu0 3
      %303 = vperm.xlu0 %302, %v200
      %v304 = vpop.permute.xlu0 %303
      %v306 = vadd.f32 %v298, %v304
      %v307 = vadd.f32 %v299, %v304
      %v308 = vadd.f32 %v300, %v304
      %v309 = vadd.f32 %v301, %v304
      %vm310 = vcmask 1041408
      %v311 = vsel %vm310, %v306, %v306
      %v312 = vsel %vm310, %v307, %v307
      %v313 = vsel %vm310, %v308, %v308
      %v314 = vsel %vm310, %v309, %v309
      %v319 = vcombine.low %v311, %v312
      %v320 = vcombine.low %v313, %v314
      %323 = vst [vmem:[%s198] sm:$0x77] %v319
      %324 = vst [vmem:[%s198 + $0x8] sm:$0x77] %v320
      %s325 = smul.u32 4, %s18
      %p326 = scmp.lt.s32.totalorder %s17, 1
      %s327 = scalar_select %p326, %s17, 1
      %p328 = scmp.lt.s32.totalorder %s325, 3
      %s329 = scalar_select %p328, %s325, 3
      %s330 = smul.addr %s327, 4
      %s331 = sadd.s32 %s329, %s330
      %s332 = smul.addr %s331, 4
      %s333 = scalar_lea.vmem %s2, %s332
      // Predicated region
      $region29: #{tpu_custom_call.1} parent=27 // pred_check
        %p334 = pneg %p99
      $region30: #{tpu_custom_call.1} parent=27 // pred_check_branch
        %336 = sbr.rel (%p334) target = $region32
      $region31: #{tpu_custom_call.1} parent=27 // pred_region
        %s337 = smul.u32 4, %s18
      $region32: #{tpu_custom_call.1} parent=27 // pred_fallthru
        _
    $region28: #{tpu_custom_call.1} parent=5 // pred_fallthru
      _
    %p338 = scmp.le.s32.totalorder 2, %s8
    // Predicated region
    $region33: #{tpu_custom_call.1} parent=5 // pred_check
      %p339 = pneg %p338
    $region34: #{tpu_custom_call.1} parent=5 // pred_check_branch
      %341 = sbr.rel (%p339) target = $region36
    $region35: #{tpu_custom_call.1} parent=5 // pred_region
      %s342 = ssub.s32 %s8, 2
      // Predicated region
      $region37: #{tpu_custom_call.1} parent=35 // pred_check
        %p343 = pneg %p105
      $region38: #{tpu_custom_call.1} parent=35 // pred_check_branch
        %345 = sbr.rel (%p343) target = $region40
      $region39: #{tpu_custom_call.1} parent=35 // pred_region
        %s346 = smul.u32 4, %s20
        %p347 = scmp.lt.s32.totalorder %s19, 1
        %s348 = scalar_select %p347, %s19, 1
        %p349 = scmp.lt.s32.totalorder %s346, 3
        %s350 = scalar_select %p349, %s346, 3
        %s351 = smul.addr %s348, 4
        %s352 = sadd.s32 %s350, %s351
        %s353 = smul.addr %s352, 4
        %s354 = scalar_lea.vmem %s2, %s353
      $region40: #{tpu_custom_call.1} parent=35 // pred_fallthru
        _
    $region36: #{tpu_custom_call.1} parent=5 // pred_fallthru
      _
  $region6: #{tpu_custom_call.1} parent=0 // loop_footer
    %s12 = sadd.s32 1, %s8
  $region7: #{tpu_custom_call.1} parent=0 // loop_footer_branch
    %7 = sbr.rel target = $region3
  $region8: #{tpu_custom_call.1} parent=0 // loop_exit
    _

</llo_original>
